<compile_context>
chip_gen: v5e
topology: v5e:2x2
jax: 0.10.0
libtpu: 0.0.40
codegen_flags: <defaults>
</compile_context>

<pallas_src>
import functools

import jax
import jax.numpy as jnp
from jax import lax
from jax.experimental import pallas as pl
from jax.experimental.pallas import tpu as pltpu


_UNROLL_DEPTH_LIMIT = 8   # fully unroll the depth loop up to this many steps
_LANE = 128               # vreg lane width
_SUBLANE = 8              # vreg sublane granularity (f32)


def _dynamic_graph_kernel(x_ref, w_ref, b_ref, o_ref, *, depth: int):
    x = x_ref[...]                                   # (TB, Fp) f32
    w = w_ref[...]                                   # (Fp, Fp) pre-transposed (in, out)
    b = jnp.broadcast_to(b_ref[...], x.shape)        # hoisted: one broadcast total

    def relu_step(y):
        return jnp.maximum(
            jnp.dot(y, w, preferred_element_type=jnp.float32) + b, 0.0)

    def tanh_step(y):
        return jnp.tanh(
            jnp.dot(y, w, preferred_element_type=jnp.float32) + b)

    n_pairs, rem = divmod(depth, 2)
    if depth <= _UNROLL_DEPTH_LIMIT:
        # Small fixed depth: full unroll at trace time (mirrors the dynamic
        # graph construction, gives the LLO scheduler maximum visibility).
        for i in range(depth):
            x = relu_step(x) if i % 2 == 0 else tanh_step(x)
    else:
        # Large depth: loop over (ReLU, Tanh) pairs to bound code size and
        # vreg live ranges.
        x = lax.fori_loop(0, n_pairs, lambda _, y: tanh_step(relu_step(y)), x)
        if rem:            # depth odd => last step index is even => ReLU
            x = relu_step(x)

    o_ref[...] = x.astype(o_ref.dtype)


def dynamic_graph_forward(x, weight, bias, depth: int):
    """x: (B, 10) f32, weight: (10, 10) torch-layout (out, in), bias: (10,)."""
    B, F = x.shape
    round_up = lambda n, m: m * -(-n // m)

    # Lane-pad the feature dim to 128.  Padded weight rows/cols and bias are
    # zero, so padded output lanes stay exactly 0 through ReLU/Tanh: numerics
    # of the first F columns are bit-identical to the unpadded computation.
    Fp = round_up(F, _LANE)

    # Batch tile: multiple of 8 (sublane granularity), capped so double-
    # buffered tiles stay far below the scoped-VMEM default on every chip
    # generation (incl. v7x's 64 MiB / TC).  512x128 f32 = 256 KiB per tile.
    TB = min(round_up(max(B, 1), _SUBLANE), 512)
    Bp = round_up(B, TB)

    x_p = jnp.zeros((Bp, Fp), jnp.float32).at[:B, :F].set(x)
    w_p = jnp.zeros((Fp, Fp), jnp.float32).at[:F, :F].set(weight)   # (out, in)
    w_t = w_p.T                                                     # (in, out) so y = x @ W.T
    b_p = jnp.zeros((1, Fp), jnp.float32).at[0, :F].set(bias)

    kernel = functools.partial(_dynamic_graph_kernel, depth=depth)
    out = pl.pallas_call(
        kernel,
        out_shape=jax.ShapeDtypeStruct((Bp, Fp), jnp.float32),
        grid=(Bp // TB,),
        in_specs=[
            pl.BlockSpec((TB, Fp), lambda i: (i, 0)),   # batch-tiled activations
            pl.BlockSpec((Fp, Fp), lambda i: (0, 0)),   # weight stays resident
            pl.BlockSpec((1, Fp), lambda i: (0, 0)),    # bias stays resident
        ],
        out_specs=pl.BlockSpec((TB, Fp), lambda i: (i, 0)),
        compiler_params=pltpu.CompilerParams(
            dimension_semantics=("parallel",)),          # use both TCs on v7x
    )(x_p, w_t, b_p)

    out = out[:B, :F]
    operations = ["ReLU" if i % 2 == 0 else "Tanh" for i in range(depth)]
    return out, operations


def reference_forward(x, weight, bias, depth: int):
    y = x
    for i in range(depth):
        y = y @ weight.T + bias
        y = jnp.maximum(y, 0.0) if i % 2 == 0 else jnp.tanh(y)
    return y


if __name__ == "__main__":
    key = jax.random.PRNGKey(0)
    kx, kw, kb = jax.random.split(key, 3)

    B, F = 4, 10          # nn.Linear(10, 10) => feature dim is 10
    depth = 5

    x = jax.random.normal(kx, (B, F), dtype=jnp.float32)
    # Deterministic "torch-like" init: uniform(-1/sqrt(in), 1/sqrt(in))
    bound = 1.0 / jnp.sqrt(jnp.float32(F))
    weight = jax.random.uniform(kw, (F, F), jnp.float32, -bound, bound)  # (out, in)
    bias = jax.random.uniform(kb, (F,), jnp.float32, -bound, bound)

    out, ops = dynamic_graph_forward(x, weight, bias, depth)
    out = jax.block_until_ready(out)

    ref = reference_forward(x, weight, bias, depth)
    assert out.shape == (B, F)
    assert ops == ["ReLU", "Tanh", "ReLU", "Tanh", "ReLU"]
    assert jnp.allclose(out, ref, atol=1e-5, rtol=1e-5), "mismatch vs reference"

    # Also exercise the fori_loop path (depth > unroll limit) and the batch
    # grid (B not a multiple of the tile), still checked against the pure-JAX
    # reference.
    B2, depth2 = 37, 11
    x2 = jax.random.normal(jax.random.PRNGKey(1), (B2, F), dtype=jnp.float32)
    out2, ops2 = dynamic_graph_forward(x2, weight, bias, depth2)
    out2 = jax.block_until_ready(out2)
    ref2 = reference_forward(x2, weight, bias, depth2)
    assert out2.shape == (B2, F)
    assert ops2[:2] == ["ReLU", "Tanh"] and len(ops2) == depth2
    assert jnp.allclose(out2, ref2, atol=1e-5, rtol=1e-5), "mismatch (deep path)"

    print("KERNEL_OK")
</pallas_src>

<mosaic_0001>
module attributes {stable_mosaic.version = 11 : i64} {
  func.func @_dynamic_graph_kernel(%arg0: i32, %arg1: memref<8x128xf32, #tpu.memory_space<vmem>>, %arg2: memref<128x128xf32, #tpu.memory_space<vmem>>, %arg3: memref<1x128xf32, #tpu.memory_space<vmem>>, %arg4: memref<8x128xf32, #tpu.memory_space<vmem>>) attributes {dimension_semantics = [#tpu.dimension_semantics<parallel>], iteration_bounds = array<i64: 1>, scalar_prefetch = 0 : i64, scratch_operands = 0 : i64, tpu.core_type = #tpu.core_type<tc>, window_params = [{transform_indices = @transform_0, window_bounds = array<i64: 8, 128>}, {pipeline_mode = #tpu.pipeline_mode<synchronous>, transform_indices = @transform_1, window_bounds = array<i64: 128, 128>}, {pipeline_mode = #tpu.pipeline_mode<synchronous>, transform_indices = @transform_2, window_bounds = array<i64: 1, 128>}, {transform_indices = @transform_3, window_bounds = array<i64: 8, 128>}]} {
    %c0 = arith.constant 0 : index
    %c0_0 = arith.constant 0 : index
    %0 = vector.load %arg1[%c0, %c0_0] : memref<8x128xf32, #tpu.memory_space<vmem>>, vector<8x128xf32>
    %c0_1 = arith.constant 0 : index
    %c0_2 = arith.constant 0 : index
    %1 = vector.load %arg2[%c0_1, %c0_2] : memref<128x128xf32, #tpu.memory_space<vmem>>, vector<128x128xf32>
    %c0_3 = arith.constant 0 : index
    %c0_4 = arith.constant 0 : index
    %2 = vector.load %arg3[%c0_3, %c0_4] : memref<1x128xf32, #tpu.memory_space<vmem>>, vector<1x128xf32>
    %3 = vector.shape_cast %2 : vector<1x128xf32> to vector<1x128xf32>
    %4 = vector.broadcast %3 : vector<1x128xf32> to vector<8x128xf32>
    %cst = arith.constant dense<0.000000e+00> : vector<8x128xf32>
    %5 = tpu.matmul %0, %1, %cst {dimension_numbers = #tpu.dot_dimension_numbers<[1], [0], [0], [1], [0, 0, 1, 1], [], []>} : vector<8x128xf32>, vector<128x128xf32>, vector<8x128xf32> -> vector<8x128xf32>
    %6 = arith.addf %5, %4 : vector<8x128xf32>
    %cst_5 = arith.constant 0.000000e+00 : f32
    %7 = vector.broadcast %cst_5 : f32 to vector<8x128xf32>
    %8 = arith.maximumf %6, %7 : vector<8x128xf32>
    %cst_6 = arith.constant dense<0.000000e+00> : vector<8x128xf32>
    %9 = tpu.matmul %8, %1, %cst_6 {dimension_numbers = #tpu.dot_dimension_numbers<[1], [0], [0], [1], [0, 0, 1, 1], [], []>} : vector<8x128xf32>, vector<128x128xf32>, vector<8x128xf32> -> vector<8x128xf32>
    %10 = arith.addf %9, %4 : vector<8x128xf32>
    %11 = math.tanh %10 : vector<8x128xf32>
    %cst_7 = arith.constant dense<0.000000e+00> : vector<8x128xf32>
    %12 = tpu.matmul %11, %1, %cst_7 {dimension_numbers = #tpu.dot_dimension_numbers<[1], [0], [0], [1], [0, 0, 1, 1], [], []>} : vector<8x128xf32>, vector<128x128xf32>, vector<8x128xf32> -> vector<8x128xf32>
    %13 = arith.addf %12, %4 : vector<8x128xf32>
    %cst_8 = arith.constant 0.000000e+00 : f32
    %14 = vector.broadcast %cst_8 : f32 to vector<8x128xf32>
    %15 = arith.maximumf %13, %14 : vector<8x128xf32>
    %cst_9 = arith.constant dense<0.000000e+00> : vector<8x128xf32>
    %16 = tpu.matmul %15, %1, %cst_9 {dimension_numbers = #tpu.dot_dimension_numbers<[1], [0], [0], [1], [0, 0, 1, 1], [], []>} : vector<8x128xf32>, vector<128x128xf32>, vector<8x128xf32> -> vector<8x128xf32>
    %17 = arith.addf %16, %4 : vector<8x128xf32>
    %18 = math.tanh %17 : vector<8x128xf32>
    %cst_10 = arith.constant dense<0.000000e+00> : vector<8x128xf32>
    %19 = tpu.matmul %18, %1, %cst_10 {dimension_numbers = #tpu.dot_dimension_numbers<[1], [0], [0], [1], [0, 0, 1, 1], [], []>} : vector<8x128xf32>, vector<128x128xf32>, vector<8x128xf32> -> vector<8x128xf32>
    %20 = arith.addf %19, %4 : vector<8x128xf32>
    %cst_11 = arith.constant 0.000000e+00 : f32
    %21 = vector.broadcast %cst_11 : f32 to vector<8x128xf32>
    %22 = arith.maximumf %20, %21 : vector<8x128xf32>
    %c0_12 = arith.constant 0 : index
    %c0_13 = arith.constant 0 : index
    %23 = vector.load %arg4[%c0_12, %c0_13] : memref<8x128xf32, #tpu.memory_space<vmem>>, vector<8x128xf32>
    tpu.vector_store %arg4[%c0_12, %c0_13], %22 {strides = array<i32>} : memref<8x128xf32, #tpu.memory_space<vmem>>, vector<8x128xf32>,
    return
  }
  func.func @transform_0(%arg0: i32) -> (i32, i32) {
    %c0_i32 = arith.constant 0 : i32
    %c0_i32_0 = arith.constant 0 : i32
    return %arg0, %c0_i32 : i32, i32
  }
  func.func @transform_1(%arg0: i32) -> (i32, i32) {
    %c0_i32 = arith.constant 0 : i32
    %c0_i32_0 = arith.constant 0 : i32
    %c0_i32_1 = arith.constant 0 : i32
    return %c0_i32, %c0_i32_0 : i32, i32
  }
  func.func @transform_2(%arg0: i32) -> (i32, i32) {
    %c0_i32 = arith.constant 0 : i32
    %c0_i32_0 = arith.constant 0 : i32
    %c0_i32_1 = arith.constant 0 : i32
    return %c0_i32, %c0_i32_0 : i32, i32
  }
  func.func @transform_3(%arg0: i32) -> (i32, i32) {
    %c0_i32 = arith.constant 0 : i32
    %c0_i32_0 = arith.constant 0 : i32
    return %arg0, %c0_i32 : i32, i32
  }
}

</mosaic_0001>

<llo_original>
// kernel: tpu_custom_call.1
$region0: #{tpu_custom_call.1}
  #allocation0 [shape = 'u32[]', space=smem, size = 0x4, offset = 0x4, fixed_abs, tag = 'smem constant byte address 0x4 - core index']
  #allocation1 [shape = 'u32[72,128]{1,0:T(1,128)}', space=vmem, size = 0x9000, scoped, tag = 'internal scratch']
  %s0 = inlined_call_operand.hbm [shape: f32[8,128], index: 0, kind: input, shape index: {}]
  %s1 = inlined_call_operand.hbm [shape: f32[128,128], index: 1, kind: input, shape index: {}]
  %s2 = inlined_call_operand.vmem [shape: f32[1,128], index: 2, kind: input, shape index: {}]
  %s3 = inlined_call_operand.hbm [shape: f32[8,128], index: 3, kind: output, shape index: {}]
  %s4 = sld [smem:[#allocation0]]
  $region30: #{tpu_custom_call.1} parent=0
    _
  %s6 = ssub.s32 1, %s4
  %s7 = scalar_select 0, %s6, %s4
  $region1: #{tpu_custom_call.1} parent=0
    #allocation2 [shape = 'u8[4096]{0}', space=vmem, size = 0x1000, scoped, tag = 'input window, operand 0, single buffered']
    #allocation3 [shape = 's32[1]{0}', space=sflag, size = 0x4, scoped, tag = 'scoped memory for tpu_custom_call.1']
    #allocation4 [shape = 's32[1]{0}', space=sflag, size = 0x4, scoped, tag = 'scoped memory for tpu_custom_call.1']
    #allocation5 [shape = 'u8[65536]{0}', space=vmem, size = 0x10000, scoped, tag = 'input window, operand 1, single buffered']
    #allocation6 [shape = 's32[1]{0}', space=sflag, size = 0x4, scoped, tag = 'scoped memory for tpu_custom_call.1']
    #allocation7 [shape = 'u8[4096]{0}', space=vmem, size = 0x1000, scoped, tag = 'output window, operand 0, single buffered']
    %8 = vsyncpa [#allocation3], 0
    %9 = vsyncpa [#allocation6], 0
    %10 = vsyncpa [#allocation4], 0
    // Predicated region
    $region2: #{tpu_custom_call.1} parent=1 // pred_check
      _
    $region3: #{tpu_custom_call.1} parent=1 // pred_check_branch
      %12 = sbr.rel (0) target = $region5
    $region4: #{tpu_custom_call.1} parent=1 // pred_region
      %14 = vsyncadd [#allocation3], 0
      %s16 = sshll.u32 %s0, 4
      %s17 = int_to_ptr.hbm [resolvable:$true] %s16
      %s18 = sshll.u32 [#allocation2], 4
      %s19 = int_to_ptr.vmem [resolvable:$true] %s18
      %21 = dma.hbm_to_vmem [thread:$0]  %s17, 128, %s19, [#allocation3]
    $region5: #{tpu_custom_call.1} parent=1 // pred_fallthru
      _
    // Predicated region
    $region6: #{tpu_custom_call.1} parent=1 // pred_check
      _
    $region7: #{tpu_custom_call.1} parent=1 // pred_check_branch
      %23 = sbr.rel (0) target = $region9
    $region8: #{tpu_custom_call.1} parent=1 // pred_region
      %25 = vsyncadd [#allocation6], 0
      %s26 = sshll.u32 %s1, 4
      %s27 = int_to_ptr.hbm [resolvable:$true] %s26
      %s28 = sshll.u32 [#allocation5], 4
      %s29 = int_to_ptr.vmem [resolvable:$true] %s28
      %34 = dma.hbm_to_vmem [thread:$0]  %s27, 2048, %s29, [#allocation6], 128, 128, 8
    $region9: #{tpu_custom_call.1} parent=1 // pred_fallthru
      _
    // Predicated region
    $region10: #{tpu_custom_call.1} parent=1 // pred_check
      _
    $region11: #{tpu_custom_call.1} parent=1 // pred_check_branch
      %36 = sbr.rel (0) target = $region13
    $region12: #{tpu_custom_call.1} parent=1 // pred_region
      _
    $region13: #{tpu_custom_call.1} parent=1 // pred_fallthru
      _
    // Predicated region
    $region14: #{tpu_custom_call.1} parent=1 // pred_check
      _
    $region15: #{tpu_custom_call.1} parent=1 // pred_check_branch
      %38 = sbr.rel (0) target = $region17
    $region16: #{tpu_custom_call.1} parent=1 // pred_region
      %40 = dma.done [#allocation3], 128
    $region17: #{tpu_custom_call.1} parent=1 // pred_fallthru
      _
    // Predicated region
    $region18: #{tpu_custom_call.1} parent=1 // pred_check
      _
    $region19: #{tpu_custom_call.1} parent=1 // pred_check_branch
      %42 = sbr.rel (0) target = $region21
    $region20: #{tpu_custom_call.1} parent=1 // pred_region
      %44 = dma.done [#allocation6], 2048
    $region21: #{tpu_custom_call.1} parent=1 // pred_fallthru
      _
    %v45 = vld [vmem:[#allocation2] sm:$0xff]
    %v46 = vld [vmem:[#allocation5] sm:$0xff]
    %v47 = vld [vmem:[#allocation5 + $0x8] sm:$0xff]
    %v48 = vld [vmem:[#allocation5 + $0x10] sm:$0xff]
    %v49 = vld [vmem:[#allocation5 + $0x18] sm:$0xff]
    %v50 = vld [vmem:[#allocation5 + $0x20] sm:$0xff]
    %v51 = vld [vmem:[#allocation5 + $0x28] sm:$0xff]
    %v52 = vld [vmem:[#allocation5 + $0x30] sm:$0xff]
    %v53 = vld [vmem:[#allocation5 + $0x38] sm:$0xff]
    %v54 = vld [vmem:[#allocation5 + $0x40] sm:$0xff]
    %v55 = vld [vmem:[#allocation5 + $0x48] sm:$0xff]
    %v56 = vld [vmem:[#allocation5 + $0x50] sm:$0xff]
    %v57 = vld [vmem:[#allocation5 + $0x58] sm:$0xff]
    %v58 = vld [vmem:[#allocation5 + $0x60] sm:$0xff]
    %v59 = vld [vmem:[#allocation5 + $0x68] sm:$0xff]
    %v60 = vld [vmem:[#allocation5 + $0x70] sm:$0xff]
    %v61 = vld [vmem:[#allocation5 + $0x78] sm:$0xff]
    %v62 = vld [vmem:[%s2] sm:$0x1]
    %v64 = vperm.slane %v62, 0
    %66 = vmatpush.msra.mxu0 %v61
    %67 = vmatpush.msra.mxu0 %v60
    %68 = vmatpush.msra.mxu0 %v59
    %69 = vmatpush.msra.mxu0 %v58
    %70 = vmatpush.msra.mxu0 %v57
    %71 = vmatpush.msra.mxu0 %v56
    %72 = vmatpush.msra.mxu0 %v55
    %73 = vmatpush.msra.mxu0 %v54
    %74 = vmatpush.msra.mxu0 %v53
    %75 = vmatpush.msra.mxu0 %v52
    %76 = vmatpush.msra.mxu0 %v51
    %77 = vmatpush.msra.mxu0 %v50
    %78 = vmatpush.msra.mxu0 %v49
    %79 = vmatpush.msra.mxu0 %v48
    %80 = vmatpush.msra.mxu0 %v47
    %81 = vmatpush.msra.mxu0 %v46
    %82 = vmatmul.f32.gmra.mxu0 %v45
    %v83 = vpop.f32.mrf.mxu0
    %v84 = vadd.f32 %v64, %v83
    %85 = vdwg.mxu0
    %v86 = vmax.f32 %v84, 0.0
    %87 = vmatpush.msra.mxu0 %v61
    %88 = vmatpush.msra.mxu0 %v60
    %89 = vmatpush.msra.mxu0 %v59
    %90 = vmatpush.msra.mxu0 %v58
    %91 = vmatpush.msra.mxu0 %v57
    %92 = vmatpush.msra.mxu0 %v56
    %93 = vmatpush.msra.mxu0 %v55
    %94 = vmatpush.msra.mxu0 %v54
    %95 = vmatpush.msra.mxu0 %v53
    %96 = vmatpush.msra.mxu0 %v52
    %97 = vmatpush.msra.mxu0 %v51
    %98 = vmatpush.msra.mxu0 %v50
    %99 = vmatpush.msra.mxu0 %v49
    %100 = vmatpush.msra.mxu0 %v48
    %101 = vmatpush.msra.mxu0 %v47
    %102 = vmatpush.msra.mxu0 %v46
    %103 = vmatmul.f32.gmra.mxu0 %v86
    %v104 = vpop.f32.mrf.mxu0
    %v105 = vadd.f32 %v64, %v104
    %106 = vdwg.mxu0
    %v107 = vtanh.pop %v105
    %108 = vmatpush.msra.mxu0 %v61
    %109 = vmatpush.msra.mxu0 %v60
    %110 = vmatpush.msra.mxu0 %v59
    %111 = vmatpush.msra.mxu0 %v58
    %112 = vmatpush.msra.mxu0 %v57
    %113 = vmatpush.msra.mxu0 %v56
    %114 = vmatpush.msra.mxu0 %v55
    %115 = vmatpush.msra.mxu0 %v54
    %116 = vmatpush.msra.mxu0 %v53
    %117 = vmatpush.msra.mxu0 %v52
    %118 = vmatpush.msra.mxu0 %v51
    %119 = vmatpush.msra.mxu0 %v50
    %120 = vmatpush.msra.mxu0 %v49
    %121 = vmatpush.msra.mxu0 %v48
    %122 = vmatpush.msra.mxu0 %v47
    %123 = vmatpush.msra.mxu0 %v46
    %124 = vmatmul.f32.gmra.mxu0 %v107
    %v125 = vpop.f32.mrf.mxu0
    %v126 = vadd.f32 %v64, %v125
    %127 = vdwg.mxu0
    %v128 = vmax.f32 %v126, 0.0
    %129 = vmatpush.msra.mxu0 %v61
    %130 = vmatpush.msra.mxu0 %v60
    %131 = vmatpush.msra.mxu0 %v59
    %132 = vmatpush.msra.mxu0 %v58
    %133 = vmatpush.msra.mxu0 %v57
    %134 = vmatpush.msra.mxu0 %v56
    %135 = vmatpush.msra.mxu0 %v55
    %136 = vmatpush.msra.mxu0 %v54
    %137 = vmatpush.msra.mxu0 %v53
    %138 = vmatpush.msra.mxu0 %v52
    %139 = vmatpush.msra.mxu0 %v51
    %140 = vmatpush.msra.mxu0 %v50
    %141 = vmatpush.msra.mxu0 %v49
    %142 = vmatpush.msra.mxu0 %v48
    %143 = vmatpush.msra.mxu0 %v47
    %144 = vmatpush.msra.mxu0 %v46
    %145 = vmatmul.f32.gmra.mxu0 %v128
    %v146 = vpop.f32.mrf.mxu0
    %v147 = vadd.f32 %v64, %v146
    %148 = vdwg.mxu0
    %v149 = vtanh.pop %v147
    %150 = vmatpush.msra.mxu0 %v61
    %151 = vmatpush.msra.mxu0 %v60
    %152 = vmatpush.msra.mxu0 %v59
    %153 = vmatpush.msra.mxu0 %v58
    %154 = vmatpush.msra.mxu0 %v57
    %155 = vmatpush.msra.mxu0 %v56
    %156 = vmatpush.msra.mxu0 %v55
    %157 = vmatpush.msra.mxu0 %v54
    %158 = vmatpush.msra.mxu0 %v53
    %159 = vmatpush.msra.mxu0 %v52
    %160 = vmatpush.msra.mxu0 %v51
    %161 = vmatpush.msra.mxu0 %v50
    %162 = vmatpush.msra.mxu0 %v49
    %163 = vmatpush.msra.mxu0 %v48
    %164 = vmatpush.msra.mxu0 %v47
    %165 = vmatpush.msra.mxu0 %v46
    %166 = vmatmul.f32.gmra.mxu0 %v149
    %v167 = vpop.f32.mrf.mxu0
    %v168 = vadd.f32 %v64, %v167
    %169 = vdwg.mxu0
    %v170 = vmax.f32 %v168, 0.0
    %171 = vst [vmem:[#allocation7] sm:$0xff] %v170
    // Predicated region
    $region22: #{tpu_custom_call.1} parent=1 // pred_check
      _
    $region23: #{tpu_custom_call.1} parent=1 // pred_check_branch
      %173 = sbr.rel (0) target = $region25
    $region24: #{tpu_custom_call.1} parent=1 // pred_region
      %175 = vsyncadd [#allocation4], 0
      %s177 = sshll.u32 [#allocation7], 4
      %s178 = int_to_ptr.vmem [resolvable:$true] %s177
      %s179 = sshll.u32 %s3, 4
      %s180 = int_to_ptr.hbm [resolvable:$true] %s179
      %182 = dma.vmem_to_hbm [thread:$0]  %s178, 128, %s180, [#allocation4]
    $region25: #{tpu_custom_call.1} parent=1 // pred_fallthru
      _
    // Predicated region
    $region26: #{tpu_custom_call.1} parent=1 // pred_check
      _
    $region27: #{tpu_custom_call.1} parent=1 // pred_check_branch
      %184 = sbr.rel (0) target = $region29
    $region28: #{tpu_custom_call.1} parent=1 // pred_region
      %186 = dma.done [#allocation4], 128
    $region29: #{tpu_custom_call.1} parent=1 // pred_fallthru
      _
    %187 = vsyncpa [#allocation3], 1
    %188 = vsyncpa [#allocation6], 1
    %189 = vsyncpa [#allocation4], 1

</llo_original>
